<compile_context>
chip_gen: v7x
topology: tpu7x:2x2x1
jax: 0.10.0
libtpu: 0.0.40
codegen_flags: <defaults>
</compile_context>

<pallas_src>
import functools

import jax
import jax.numpy as jnp
from jax.experimental import pallas as pl
from jax.experimental.pallas import tpu as pltpu

EPS = 1e-5
MOMENTUM = 0.1

_LANE = 128
_SUBLANE = 8
# Per-block byte budget for the streaming path; in+out double-buffered => ~4x
# this resident in VMEM.
_BLOCK_BUDGET = 2 * 1024 * 1024
# Fused single-shot path threshold (elements).  256K elems == 1 MiB of f32, so
# even with f32 temporaries + double-buffered in/out the fused kernel stays
# well inside the 16 MiB v5e scoped-VMEM default.
_FUSED_MAX_ELEMS = 256 * 1024


def _round_up(a, b):
    return (a + b - 1) // b * b


# ---------------------------------------------------------------------------
# Fused single-shot kernels (whole tensor resident; x read from HBM once)
# ---------------------------------------------------------------------------

def _bn4d_fused_kernel(x_ref, gamma_ref, beta_ref, mm_ref, mv_ref,
                       y_ref, new_mm_ref, new_mv_ref, *, inv_count):
    x = x_ref[...].astype(jnp.float32)                       # (N, C, HW)
    s = jnp.sum(x, axis=2, keepdims=True)                    # lane reduce -> (N, C, 1)
    mean = jnp.sum(s, axis=0, keepdims=True) * inv_count     # (1, C, 1)
    d = x - mean
    ss = jnp.sum(d * d, axis=2, keepdims=True)               # (N, C, 1)
    var = jnp.sum(ss, axis=0, keepdims=True) * inv_count     # (1, C, 1)
    scale = gamma_ref[...] * jax.lax.rsqrt(var + EPS)        # EUP rsqrt, no divide
    y_ref[...] = (d * scale + beta_ref[...]).astype(y_ref.dtype)
    new_mm_ref[...] = MOMENTUM * mm_ref[...] + (1.0 - MOMENTUM) * mean
    new_mv_ref[...] = MOMENTUM * mv_ref[...] + (1.0 - MOMENTUM) * var


def _bn2d_fused_kernel(x_ref, gamma_ref, beta_ref, mm_ref, mv_ref,
                       y_ref, new_mm_ref, new_mv_ref, *, inv_count):
    x = x_ref[...].astype(jnp.float32)                       # (N, C)
    mean = jnp.sum(x, axis=0, keepdims=True) * inv_count     # (1, C)
    d = x - mean
    var = jnp.sum(d * d, axis=0, keepdims=True) * inv_count  # (1, C)
    scale = gamma_ref[...] * jax.lax.rsqrt(var + EPS)
    y_ref[...] = (d * scale + beta_ref[...]).astype(y_ref.dtype)
    new_mm_ref[...] = MOMENTUM * mm_ref[...] + (1.0 - MOMENTUM) * mean
    new_mv_ref[...] = MOMENTUM * mv_ref[...] + (1.0 - MOMENTUM) * var


# ---------------------------------------------------------------------------
# Streaming 4-D (NCHW) path: x viewed as (N, C, H*W); channels on sublanes,
# spatial on lanes
# ---------------------------------------------------------------------------

def _bn4d_stats_kernel(x_ref, gamma_ref, beta_ref, mm_ref, mv_ref,
                       scale_ref, bias_ref, new_mm_ref, new_mv_ref,
                       sum_ref, sumsq_ref, *, inv_count):
    i = pl.program_id(0)
    j = pl.program_id(1)

    @pl.when((i == 0) & (j == 0))
    def _init():
        sum_ref[...] = jnp.zeros_like(sum_ref)
        sumsq_ref[...] = jnp.zeros_like(sumsq_ref)

    x = x_ref[...].astype(jnp.float32)                      # (bn, C, T)
    # Per-channel partial sums: lane reduce, then fold the small batch dim.
    s1 = jnp.sum(x, axis=2, keepdims=True)                  # (bn, C, 1)
    s2 = jnp.sum(x * x, axis=2, keepdims=True)              # (bn, C, 1)
    sum_ref[...] += jnp.sum(s1, axis=0, keepdims=True)      # (1, C, 1)
    sumsq_ref[...] += jnp.sum(s2, axis=0, keepdims=True)

    @pl.when((i == pl.num_programs(0) - 1) & (j == pl.num_programs(1) - 1))
    def _finalize():
        mean = sum_ref[...] * inv_count                     # (1, C, 1)
        var = jnp.maximum(sumsq_ref[...] * inv_count - mean * mean, 0.0)
        inv_std = jax.lax.rsqrt(var + EPS)                  # EUP, no per-elem divide
        scale = gamma_ref[...] * inv_std
        scale_ref[...] = scale
        bias_ref[...] = beta_ref[...] - mean * scale
        # Running stats written once, on the final grid step only.
        new_mm_ref[...] = MOMENTUM * mm_ref[...] + (1.0 - MOMENTUM) * mean
        new_mv_ref[...] = MOMENTUM * mv_ref[...] + (1.0 - MOMENTUM) * var


def _bn4d_norm_kernel(x_ref, scale_ref, bias_ref, y_ref):
    x = x_ref[...].astype(jnp.float32)                      # (bn, C, T)
    y_ref[...] = (x * scale_ref[...] + bias_ref[...]).astype(y_ref.dtype)


def _choose_4d_blocks(N, C, HW, itemsize):
    hw128 = _round_up(HW, _LANE)
    max_tile = max(_LANE, (_BLOCK_BUDGET // max(1, C * itemsize)) // _LANE * _LANE)
    tile = min(hw128, max_tile)
    hw_pad = _round_up(HW, tile)
    bn = max(1, min(N, _BLOCK_BUDGET // max(1, C * tile * itemsize)))
    while N % bn:                                           # bn must divide N
        bn -= 1
    return bn, tile, hw_pad


def _batch_norm_4d(x, moving_mean, moving_var, gamma, beta):
    N, C, H, W = x.shape
    HW = H * W
    x3 = x.reshape(N, C, HW)            # contiguous view: no NCHW->NHWC transpose

    vec = lambda p: p.reshape(1, C, 1).astype(jnp.float32)
    g, b = vec(gamma), vec(beta)
    mm0, mv0 = vec(moving_mean), vec(moving_var)

    if x.size <= _FUSED_MAX_ELEMS:
        # Single fused kernel: one HBM read of x instead of two.
        y3, new_mm, new_mv = pl.pallas_call(
            functools.partial(_bn4d_fused_kernel, inv_count=1.0 / float(N * HW)),
            out_shape=[jax.ShapeDtypeStruct((N, C, HW), x.dtype),
                       jax.ShapeDtypeStruct((1, C, 1), jnp.float32),
                       jax.ShapeDtypeStruct((1, C, 1), jnp.float32)],
        )(x3, g, b, mm0, mv0)
        return (y3.reshape(N, C, H, W),
                new_mm.reshape(1, C, 1, 1),
                new_mv.reshape(1, C, 1, 1))

    bn, tile, hw_pad = _choose_4d_blocks(N, C, HW, x.dtype.itemsize)
    if hw_pad != HW:
        # Zero padding is harmless: zeros add nothing to sum/sumsq and we
        # divide by the true element count; padded outputs are sliced off.
        x3 = jnp.pad(x3, ((0, 0), (0, 0), (0, hw_pad - HW)))
    grid = (N // bn, hw_pad // tile)

    x_spec = pl.BlockSpec((bn, C, tile), lambda i, j: (i, 0, j))
    vec_spec = pl.BlockSpec((1, C, 1), lambda i, j: (0, 0, 0))
    vec_shape = jax.ShapeDtypeStruct((1, C, 1), jnp.float32)

    scale, bias, new_mm, new_mv = pl.pallas_call(
        functools.partial(_bn4d_stats_kernel, inv_count=1.0 / float(N * HW)),
        grid=grid,
        in_specs=[x_spec, vec_spec, vec_spec, vec_spec, vec_spec],
        out_specs=[vec_spec, vec_spec, vec_spec, vec_spec],
        out_shape=[vec_shape, vec_shape, vec_shape, vec_shape],
        scratch_shapes=[pltpu.VMEM((1, C, 1), jnp.float32),
                        pltpu.VMEM((1, C, 1), jnp.float32)],
        compiler_params=pltpu.CompilerParams(
            # Sequential accumulator: the whole grid is a reduction.
            dimension_semantics=("arbitrary", "arbitrary")),
    )(x3, g, b, mm0, mv0)

    y3 = pl.pallas_call(
        _bn4d_norm_kernel,
        grid=grid,
        in_specs=[x_spec, vec_spec, vec_spec],
        out_specs=x_spec,
        out_shape=jax.ShapeDtypeStruct((N, C, hw_pad), x.dtype),
        compiler_params=pltpu.CompilerParams(
            # Independent tiles: shard across TensorCores (v7x megacore).
            dimension_semantics=("parallel", "parallel")),
    )(x3, scale, bias)

    y = y3[:, :, :HW].reshape(N, C, H, W)
    return y, new_mm.reshape(1, C, 1, 1), new_mv.reshape(1, C, 1, 1)


# ---------------------------------------------------------------------------
# Streaming 2-D (N, C) path: channels on lanes (padded to 128), reduce over rows
# ---------------------------------------------------------------------------

def _bn2d_stats_kernel(x_ref, gamma_ref, beta_ref, mm_ref, mv_ref,
                       scale_ref, bias_ref, new_mm_ref, new_mv_ref,
                       sum_ref, sumsq_ref, *, inv_count):
    i = pl.program_id(0)

    @pl.when(i == 0)
    def _init():
        sum_ref[...] = jnp.zeros_like(sum_ref)
        sumsq_ref[...] = jnp.zeros_like(sumsq_ref)

    x = x_ref[...].astype(jnp.float32)                      # (TM, Cp)
    # Column sums on the MXU (free slot) instead of a cross-sublane XLU reduce.
    ones = jnp.ones((1, x.shape[0]), jnp.float32)
    sum_ref[...] += jnp.dot(ones, x, preferred_element_type=jnp.float32)
    sumsq_ref[...] += jnp.dot(ones, x * x, preferred_element_type=jnp.float32)

    @pl.when(i == pl.num_programs(0) - 1)
    def _finalize():
        mean = sum_ref[...] * inv_count                     # (1, Cp)
        var = jnp.maximum(sumsq_ref[...] * inv_count - mean * mean, 0.0)
        inv_std = jax.lax.rsqrt(var + EPS)
        scale = gamma_ref[...] * inv_std
        scale_ref[...] = scale
        bias_ref[...] = beta_ref[...] - mean * scale
        new_mm_ref[...] = MOMENTUM * mm_ref[...] + (1.0 - MOMENTUM) * mean
        new_mv_ref[...] = MOMENTUM * mv_ref[...] + (1.0 - MOMENTUM) * var


def _bn2d_norm_kernel(x_ref, scale_ref, bias_ref, y_ref):
    x = x_ref[...].astype(jnp.float32)                      # (TM, Cp)
    y_ref[...] = (x * scale_ref[...] + bias_ref[...]).astype(y_ref.dtype)


def _batch_norm_2d(x, moving_mean, moving_var, gamma, beta):
    N, C = x.shape

    if x.size <= _FUSED_MAX_ELEMS:
        g = gamma.reshape(1, C).astype(jnp.float32)
        b = beta.reshape(1, C).astype(jnp.float32)
        mm0 = moving_mean.reshape(1, C).astype(jnp.float32)
        mv0 = moving_var.reshape(1, C).astype(jnp.float32)
        y, new_mm, new_mv = pl.pallas_call(
            functools.partial(_bn2d_fused_kernel, inv_count=1.0 / float(N)),
            out_shape=[jax.ShapeDtypeStruct((N, C), x.dtype),
                       jax.ShapeDtypeStruct((1, C), jnp.float32),
                       jax.ShapeDtypeStruct((1, C), jnp.float32)],
        )(x, g, b, mm0, mv0)
        return y, new_mm, new_mv

    Cp = _round_up(C, _LANE)                                # lane-dense stores
    itemsize = x.dtype.itemsize
    max_tm = max(_SUBLANE,
                 (_BLOCK_BUDGET // max(1, Cp * itemsize)) // _SUBLANE * _SUBLANE)
    TM = min(_round_up(N, _SUBLANE), max_tm)
    Np = _round_up(N, TM)

    xp = x
    if Np != N or Cp != C:
        xp = jnp.pad(x, ((0, Np - N), (0, Cp - C)))         # zero pad: harmless

    def vec(p, pad_value):
        p = p.reshape(1, C).astype(jnp.float32)
        if Cp != C:
            p = jnp.pad(p, ((0, 0), (0, Cp - C)), constant_values=pad_value)
        return p

    g, b = vec(gamma, 1.0), vec(beta, 0.0)
    mm0, mv0 = vec(moving_mean, 0.0), vec(moving_var, 1.0)

    grid = (Np // TM,)
    x_spec = pl.BlockSpec((TM, Cp), lambda i: (i, 0))
    vec_spec = pl.BlockSpec((1, Cp), lambda i: (0, 0))
    vec_shape = jax.ShapeDtypeStruct((1, Cp), jnp.float32)

    scale, bias, new_mm, new_mv = pl.pallas_call(
        functools.partial(_bn2d_stats_kernel, inv_count=1.0 / float(N)),
        grid=grid,
        in_specs=[x_spec, vec_spec, vec_spec, vec_spec, vec_spec],
        out_specs=[vec_spec, vec_spec, vec_spec, vec_spec],
        out_shape=[vec_shape, vec_shape, vec_shape, vec_shape],
        scratch_shapes=[pltpu.VMEM((1, Cp), jnp.float32),
                        pltpu.VMEM((1, Cp), jnp.float32)],
        compiler_params=pltpu.CompilerParams(
            dimension_semantics=("arbitrary",)),
    )(xp, g, b, mm0, mv0)

    y = pl.pallas_call(
        _bn2d_norm_kernel,
        grid=grid,
        in_specs=[x_spec, vec_spec, vec_spec],
        out_specs=x_spec,
        out_shape=jax.ShapeDtypeStruct((Np, Cp), x.dtype),
        compiler_params=pltpu.CompilerParams(
            dimension_semantics=("parallel",)),
    )(xp, scale, bias)

    return (y[:N, :C],
            new_mm[:, :C].reshape(1, C),
            new_mv[:, :C].reshape(1, C))


# ---------------------------------------------------------------------------
# Public forward + module-like wrapper
# ---------------------------------------------------------------------------

@jax.jit
def batch_norm_forward(x, moving_mean, moving_var, gamma, beta):
    """Training-mode BatchNorm forward (same math as the PyTorch reference).

    Supports 2-D (N, C) and 4-D (N, C, H, W) inputs.  Returns
    (y, new_moving_mean, new_moving_var) with stats shaped (1, C) for 2-D
    inputs and (1, C, 1, 1) for 4-D inputs.
    """
    assert x.ndim in (2, 4), "wrong dim"
    if x.ndim == 2:
        return _batch_norm_2d(x, moving_mean, moving_var, gamma, beta)
    return _batch_norm_4d(x, moving_mean, moving_var, gamma, beta)


class BatchNorm:
    """Deterministic parameter init matching the PyTorch module __init__."""

    def __init__(self, num_features, num_dim):
        assert num_dim in (2, 4), "wrong dim"
        shape = (1, num_features) if num_dim == 2 else (1, num_features, 1, 1)
        self.moving_mean = jnp.zeros(shape, jnp.float32)
        self.moving_var = jnp.ones(shape, jnp.float32)
        self.gamma = jnp.ones(shape, jnp.float32)
        self.beta = jnp.zeros(shape, jnp.float32)

    def __call__(self, x):
        y, self.moving_mean, self.moving_var = batch_norm_forward(
            x, self.moving_mean, self.moving_var, self.gamma, self.beta)
        return y


# ---------------------------------------------------------------------------
# Pure-JAX reference (mirrors the PyTorch training-mode math)
# ---------------------------------------------------------------------------

def _ref_batch_norm(x, mm, mv, gamma, beta):
    axes = (0,) if x.ndim == 2 else (0, 2, 3)
    mean = x.mean(axis=axes, keepdims=True)
    var = ((x - mean) ** 2).mean(axis=axes, keepdims=True)
    y = gamma * (x - mean) / jnp.sqrt(var + EPS) + beta
    new_mm = MOMENTUM * mm + (1.0 - MOMENTUM) * mean
    new_mv = MOMENTUM * mv + (1.0 - MOMENTUM) * var
    return y, new_mm, new_mv


if __name__ == "__main__":
    keys = jax.random.split(jax.random.PRNGKey(0), 8)

    # ---- small 4-D (NCHW): fused single-shot path ----
    N, C, H, W = 2, 4, 16, 16
    x4 = jax.random.normal(keys[0], (N, C, H, W), dtype=jnp.float32)
    bn4 = BatchNorm(num_features=C, num_dim=4)
    y4 = jax.block_until_ready(bn4(x4))
    y4_ref, mm4_ref, mv4_ref = _ref_batch_norm(
        x4, jnp.zeros((1, C, 1, 1)), jnp.ones((1, C, 1, 1)),
        jnp.ones((1, C, 1, 1)), jnp.zeros((1, C, 1, 1)))
    assert jnp.allclose(y4, y4_ref, atol=1e-5, rtol=1e-5)
    assert jnp.allclose(bn4.moving_mean, mm4_ref, atol=1e-5, rtol=1e-5)
    assert jnp.allclose(bn4.moving_var, mv4_ref, atol=1e-5, rtol=1e-5)

    # ---- small 2-D (N, C): fused single-shot path ----
    N2, C2 = 16, 32
    x2 = jax.random.normal(keys[1], (N2, C2), dtype=jnp.float32)
    bn2 = BatchNorm(num_features=C2, num_dim=2)
    y2 = jax.block_until_ready(bn2(x2))
    y2_ref, mm2_ref, mv2_ref = _ref_batch_norm(
        x2, jnp.zeros((1, C2)), jnp.ones((1, C2)),
        jnp.ones((1, C2)), jnp.zeros((1, C2)))
    assert jnp.allclose(y2, y2_ref, atol=1e-5, rtol=1e-5)
    assert jnp.allclose(bn2.moving_mean, mm2_ref, atol=1e-5, rtol=1e-5)
    assert jnp.allclose(bn2.moving_var, mv2_ref, atol=1e-5, rtol=1e-5)

    # ---- medium 4-D: streaming two-pass path (multi-tile grid + lane padding) ----
    Nb, Cb, Hb, Wb = 16, 32, 56, 56
    x4b = jax.random.normal(keys[2], (Nb, Cb, Hb, Wb), dtype=jnp.float32)
    g4 = jax.random.normal(keys[3], (1, Cb, 1, 1), dtype=jnp.float32)
    b4 = jax.random.normal(keys[4], (1, Cb, 1, 1), dtype=jnp.float32)
    mm4b = 0.1 * jnp.ones((1, Cb, 1, 1), jnp.float32)
    mv4b = 1.5 * jnp.ones((1, Cb, 1, 1), jnp.float32)
    yb, nmm, nmv = batch_norm_forward(x4b, mm4b, mv4b, g4, b4)
    jax.block_until_ready(yb)
    yb_ref, nmm_ref, nmv_ref = _ref_batch_norm(x4b, mm4b, mv4b, g4, b4)
    assert jnp.allclose(yb, yb_ref, atol=1e-4, rtol=1e-4)
    assert jnp.allclose(nmm, nmm_ref, atol=1e-4, rtol=1e-4)
    assert jnp.allclose(nmv, nmv_ref, atol=1e-4, rtol=1e-4)

    # ---- medium 2-D: streaming two-pass path (channel padding + 2-step grid) ----
    N2b, C2b = 4096, 192
    x2b = jax.random.normal(keys[5], (N2b, C2b), dtype=jnp.float32)
    g2 = jax.random.normal(keys[6], (1, C2b), dtype=jnp.float32)
    b2 = jax.random.normal(keys[7], (1, C2b), dtype=jnp.float32)
    mm2b = 0.2 * jnp.ones((1, C2b), jnp.float32)
    mv2b = 0.8 * jnp.ones((1, C2b), jnp.float32)
    y2b, nmm2, nmv2 = batch_norm_forward(x2b, mm2b, mv2b, g2, b2)
    jax.block_until_ready(y2b)
    y2b_ref, nmm2_ref, nmv2_ref = _ref_batch_norm(x2b, mm2b, mv2b, g2, b2)
    assert jnp.allclose(y2b, y2b_ref, atol=1e-4, rtol=1e-4)
    assert jnp.allclose(nmm2, nmm2_ref, atol=1e-4, rtol=1e-4)
    assert jnp.allclose(nmv2, nmv2_ref, atol=1e-4, rtol=1e-4)

    print("KERNEL_OK")
</pallas_src>

<mosaic_0001>
module attributes {stable_mosaic.version = 11 : i64} {
  func.func @_bn4d_fused_kernel(%arg0: memref<2x4x256xf32, #tpu.memory_space<vmem>>, %arg1: memref<1x4x1xf32, #tpu.memory_space<vmem>>, %arg2: memref<1x4x1xf32, #tpu.memory_space<vmem>>, %arg3: memref<1x4x1xf32, #tpu.memory_space<vmem>>, %arg4: memref<1x4x1xf32, #tpu.memory_space<vmem>>, %arg5: memref<2x4x256xf32, #tpu.memory_space<vmem>>, %arg6: memref<1x4x1xf32, #tpu.memory_space<vmem>>, %arg7: memref<1x4x1xf32, #tpu.memory_space<vmem>>) attributes {dimension_semantics = [], scalar_prefetch = 0 : i64, scratch_operands = 0 : i64, tpu.core_type = #tpu.core_type<tc>} {
    %c0 = arith.constant 0 : index
    %c0_0 = arith.constant 0 : index
    %c0_1 = arith.constant 0 : index
    %0 = vector.load %arg0[%c0, %c0_0, %c0_1] : memref<2x4x256xf32, #tpu.memory_space<vmem>>, vector<2x4x256xf32>
    %cst = arith.constant dense<0.000000e+00> : vector<2x4xf32>
    %1 = vector.multi_reduction <add>, %0, %cst [2] : vector<2x4x256xf32> to vector<2x4xf32>
    %2 = vector.shape_cast %1 : vector<2x4xf32> to vector<2x4x1xf32>
    %cst_2 = arith.constant dense<0.000000e+00> : vector<4x1xf32>
    %3 = vector.multi_reduction <add>, %2, %cst_2 [0] : vector<2x4x1xf32> to vector<4x1xf32>
    %4 = vector.shape_cast %3 : vector<4x1xf32> to vector<1x4x1xf32>
    %cst_3 = arith.constant 0.001953125 : f32
    %5 = vector.broadcast %cst_3 : f32 to vector<1x4x1xf32>
    %6 = arith.mulf %4, %5 : vector<1x4x1xf32>
    %7 = vector.broadcast %6 : vector<1x4x1xf32> to vector<2x4x256xf32>
    %8 = arith.subf %0, %7 : vector<2x4x256xf32>
    %9 = arith.mulf %8, %8 : vector<2x4x256xf32>
    %cst_4 = arith.constant dense<0.000000e+00> : vector<2x4xf32>
    %10 = vector.multi_reduction <add>, %9, %cst_4 [2] : vector<2x4x256xf32> to vector<2x4xf32>
    %11 = vector.shape_cast %10 : vector<2x4xf32> to vector<2x4x1xf32>
    %cst_5 = arith.constant dense<0.000000e+00> : vector<4x1xf32>
    %12 = vector.multi_reduction <add>, %11, %cst_5 [0] : vector<2x4x1xf32> to vector<4x1xf32>
    %13 = vector.shape_cast %12 : vector<4x1xf32> to vector<1x4x1xf32>
    %cst_6 = arith.constant 0.001953125 : f32
    %14 = vector.broadcast %cst_6 : f32 to vector<1x4x1xf32>
    %15 = arith.mulf %13, %14 : vector<1x4x1xf32>
    %c0_7 = arith.constant 0 : index
    %c0_8 = arith.constant 0 : index
    %c0_9 = arith.constant 0 : index
    %16 = vector.load %arg1[%c0_7, %c0_8, %c0_9] : memref<1x4x1xf32, #tpu.memory_space<vmem>>, vector<1x4x1xf32>
    %cst_10 = arith.constant 9.99999974E-6 : f32
    %17 = vector.broadcast %cst_10 : f32 to vector<1x4x1xf32>
    %18 = arith.addf %15, %17 : vector<1x4x1xf32>
    %19 = math.rsqrt %18 : vector<1x4x1xf32>
    %20 = arith.mulf %16, %19 : vector<1x4x1xf32>
    %21 = vector.broadcast %20 : vector<1x4x1xf32> to vector<2x4x256xf32>
    %22 = arith.mulf %8, %21 : vector<2x4x256xf32>
    %c0_11 = arith.constant 0 : index
    %c0_12 = arith.constant 0 : index
    %c0_13 = arith.constant 0 : index
    %23 = vector.load %arg2[%c0_11, %c0_12, %c0_13] : memref<1x4x1xf32, #tpu.memory_space<vmem>>, vector<1x4x1xf32>
    %24 = vector.broadcast %23 : vector<1x4x1xf32> to vector<2x4x256xf32>
    %25 = arith.addf %22, %24 : vector<2x4x256xf32>
    %c0_14 = arith.constant 0 : index
    %c0_15 = arith.constant 0 : index
    %c0_16 = arith.constant 0 : index
    %26 = vector.load %arg5[%c0_14, %c0_15, %c0_16] : memref<2x4x256xf32, #tpu.memory_space<vmem>>, vector<2x4x256xf32>
    tpu.vector_store %arg5[%c0_14, %c0_15, %c0_16], %25 {strides = array<i32>} : memref<2x4x256xf32, #tpu.memory_space<vmem>>, vector<2x4x256xf32>,
    %c0_17 = arith.constant 0 : index
    %c0_18 = arith.constant 0 : index
    %c0_19 = arith.constant 0 : index
    %27 = vector.load %arg3[%c0_17, %c0_18, %c0_19] : memref<1x4x1xf32, #tpu.memory_space<vmem>>, vector<1x4x1xf32>
    %cst_20 = arith.constant 1.000000e-01 : f32
    %28 = vector.broadcast %cst_20 : f32 to vector<1x4x1xf32>
    %29 = arith.mulf %28, %27 : vector<1x4x1xf32>
    %cst_21 = arith.constant 0.899999976 : f32
    %30 = vector.broadcast %cst_21 : f32 to vector<1x4x1xf32>
    %31 = arith.mulf %30, %6 : vector<1x4x1xf32>
    %32 = arith.addf %29, %31 : vector<1x4x1xf32>
    %c0_22 = arith.constant 0 : index
    %c0_23 = arith.constant 0 : index
    %c0_24 = arith.constant 0 : index
    %33 = vector.load %arg6[%c0_22, %c0_23, %c0_24] : memref<1x4x1xf32, #tpu.memory_space<vmem>>, vector<1x4x1xf32>
    tpu.vector_store %arg6[%c0_22, %c0_23, %c0_24], %32 {strides = array<i32>} : memref<1x4x1xf32, #tpu.memory_space<vmem>>, vector<1x4x1xf32>,
    %c0_25 = arith.constant 0 : index
    %c0_26 = arith.constant 0 : index
    %c0_27 = arith.constant 0 : index
    %34 = vector.load %arg4[%c0_25, %c0_26, %c0_27] : memref<1x4x1xf32, #tpu.memory_space<vmem>>, vector<1x4x1xf32>
    %cst_28 = arith.constant 1.000000e-01 : f32
    %35 = vector.broadcast %cst_28 : f32 to vector<1x4x1xf32>
    %36 = arith.mulf %35, %34 : vector<1x4x1xf32>
    %cst_29 = arith.constant 0.899999976 : f32
    %37 = vector.broadcast %cst_29 : f32 to vector<1x4x1xf32>
    %38 = arith.mulf %37, %15 : vector<1x4x1xf32>
    %39 = arith.addf %36, %38 : vector<1x4x1xf32>
    %c0_30 = arith.constant 0 : index
    %c0_31 = arith.constant 0 : index
    %c0_32 = arith.constant 0 : index
    %40 = vector.load %arg7[%c0_30, %c0_31, %c0_32] : memref<1x4x1xf32, #tpu.memory_space<vmem>>, vector<1x4x1xf32>
    tpu.vector_store %arg7[%c0_30, %c0_31, %c0_32], %39 {strides = array<i32>} : memref<1x4x1xf32, #tpu.memory_space<vmem>>, vector<1x4x1xf32>,
    return
  }
}

</mosaic_0001>

<llo_original>
// kernel: batch_norm_forward.1
$region0: #{batch_norm_forward.1}
  #allocation0 [shape = 'u32[]', space=smem, size = 0x4, offset = 0x4, fixed_abs, tag = 'smem constant byte address 0x4 - core index']
  #allocation1 [shape = 'u32[144,128]{1,0:T(1,128)}', space=vmem, size = 0x12000, scoped, tag = 'internal scratch']
  %s0 = inlined_call_operand.vmem [shape: f32[2,4,256], index: 0, kind: input, shape index: {}]
  %s1 = inlined_call_operand.vmem [shape: f32[1,4,1], index: 1, kind: input, shape index: {}]
  %s2 = inlined_call_operand.vmem [shape: f32[1,4,1], index: 2, kind: input, shape index: {}]
  %s3 = inlined_call_operand.vmem [shape: f32[1,4,1], index: 3, kind: input, shape index: {}]
  %s4 = inlined_call_operand.vmem [shape: f32[1,4,1], index: 4, kind: input, shape index: {}]
  %s5 = inlined_call_operand.vmem [shape: f32[2,4,256], index: 5, kind: output, shape index: {0}]
  %s6 = inlined_call_operand.vmem [shape: f32[1,4,1], index: 6, kind: output, shape index: {1}]
  %s7 = inlined_call_operand.vmem [shape: f32[1,4,1], index: 7, kind: output, shape index: {2}]
  %8 = xla_tuple %s5, %s6, %s7
  %s9 = sld [smem:[#allocation0]]
  $region46: #{batch_norm_forward.1} parent=0
    _
  %s11 = ssub.s32 1, %s9
  %s12 = scalar_select 0, %s11, %s9
  // Predicated region
  $region2: #{batch_norm_forward.1} parent=0 // pred_check
    _
  $region3: #{batch_norm_forward.1} parent=0 // pred_check_branch
    %14 = sbr.rel (0) target = $region5
  $region4: #{batch_norm_forward.1} parent=0 // pred_region
    _
  $region5: #{batch_norm_forward.1} parent=0 // pred_fallthru
    _
  // Predicated region
  $region6: #{batch_norm_forward.1} parent=0 // pred_check
    _
  $region7: #{batch_norm_forward.1} parent=0 // pred_check_branch
    %16 = sbr.rel (0) target = $region9
  $region8: #{batch_norm_forward.1} parent=0 // pred_region
    _
  $region9: #{batch_norm_forward.1} parent=0 // pred_fallthru
    _
  // Predicated region
  $region10: #{batch_norm_forward.1} parent=0 // pred_check
    _
  $region11: #{batch_norm_forward.1} parent=0 // pred_check_branch
    %18 = sbr.rel (0) target = $region13
  $region12: #{batch_norm_forward.1} parent=0 // pred_region
    _
  $region13: #{batch_norm_forward.1} parent=0 // pred_fallthru
    _
  // Predicated region
  $region14: #{batch_norm_forward.1} parent=0 // pred_check
    _
  $region15: #{batch_norm_forward.1} parent=0 // pred_check_branch
    %20 = sbr.rel (0) target = $region17
  $region16: #{batch_norm_forward.1} parent=0 // pred_region
    _
  $region17: #{batch_norm_forward.1} parent=0 // pred_fallthru
    _
  // Predicated region
  $region18: #{batch_norm_forward.1} parent=0 // pred_check
    _
  $region19: #{batch_norm_forward.1} parent=0 // pred_check_branch
    %22 = sbr.rel (0) target = $region21
  $region20: #{batch_norm_forward.1} parent=0 // pred_region
    _
  $region21: #{batch_norm_forward.1} parent=0 // pred_fallthru
    _
  %v23 = vld [vmem:[%s0] sm:$0xff]
  %v24 = vld [vmem:[%s0 + $0x8] sm:$0xff]
  %v27 = vcombine.high %v23, %v23
  %v28 = vcombine.high %v24, %v24
  %vm31 = vcmask 1043456
  %v32 = vsel %vm31, %v23, 0.0
  %v33 = vsel %vm31, %v27, 0.0
  %v34 = vadd.f32 %v32, %v33
  %35 = vadd.xlane.f32.xlu0 %v34
  %v36 = vpop.xlane.xlu0 %35
  %v37 = vsel %vm31, %v24, 0.0
  %v38 = vsel %vm31, %v28, 0.0
  %v39 = vadd.f32 %v37, %v38
  %40 = vadd.xlane.f32.xlu0 %v39
  %v41 = vpop.xlane.xlu0 %40
  %v42 = vsel %vm31, %v36, 0.0
  %v43 = vsel %vm31, %v41, 0.0
  %v44 = vadd.f32 %v42, %v43
  %v45 = vmul.f32 %v44, 0.001953125
  %v48 = vunpack.c.l.s4 839922192
  %v49 = vunpack.c.0.s8 %v48
  %v50 = vlaneseq
  %v51 = vshrl.u32 %v50, 7
  %v52 = vsub.s32 %v49, %v51
  %v53 = vrot.slane %v45, %v52
  %v55 = vsub.f32 %v23, %v53
  %v56 = vsub.f32 %v24, %v53
  %v57 = vmul.f32 %v55, %v55
  %v58 = vmul.f32 %v56, %v56
  %v61 = vcombine.high %v57, %v57
  %v62 = vcombine.high %v58, %v58
  %v65 = vsel %vm31, %v57, 0.0
  %v66 = vsel %vm31, %v61, 0.0
  %v67 = vadd.f32 %v65, %v66
  %68 = vadd.xlane.f32.xlu0 %v67
  %v69 = vpop.xlane.xlu0 %68
  %v70 = vsel %vm31, %v58, 0.0
  %v71 = vsel %vm31, %v62, 0.0
  %v72 = vadd.f32 %v70, %v71
  %73 = vadd.xlane.f32.xlu0 %v72
  %v74 = vpop.xlane.xlu0 %73
  %v75 = vsel %vm31, %v69, 0.0
  %v76 = vsel %vm31, %v74, 0.0
  %v77 = vadd.f32 %v75, %v76
  %v78 = vmul.f32 %v77, 0.001953125
  %v79 = vld [vmem:[%s1] sm:$0xf]
  %v80 = vadd.f32 %v78, 1e-05
  %v81 = vrsqrt.pop %v80
  %v82 = vmul.f32 %v79, %v81
  %84 = vset.pattern.permute.xlu0 0
  %85 = vperm.xlu0 %84, %v82
  %v86 = vpop.permute.xlu0 %85
  %v88 = vunpack.c.l.s4 839922192
  %v89 = vunpack.c.0.s8 %v88
  %v90 = vlaneseq
  %v91 = vshrl.u32 %v90, 7
  %v92 = vsub.s32 %v89, %v91
  %v93 = vrot.slane %v86, %v92
  %v95 = vmul.f32 %v55, %v93
  %v96 = vmul.f32 %v56, %v93
  %v97 = vld [vmem:[%s2] sm:$0xf]
  %99 = vset.pattern.permute.xlu0 0
  %100 = vperm.xlu0 %99, %v97
  %v101 = vpop.permute.xlu0 %100
  %v103 = vunpack.c.l.s4 839922192
  %v104 = vunpack.c.0.s8 %v103
  %v105 = vlaneseq
  %v106 = vshrl.u32 %v105, 7
  %v107 = vsub.s32 %v104, %v106
  %v108 = vrot.slane %v101, %v107
  %v110 = vadd.f32 %v95, %v108
  %v111 = vadd.f32 %v96, %v108
  %112 = vst [vmem:[%s5] sm:$0xff] %v110
  %113 = vst [vmem:[%s5 + $0x8] sm:$0xff] %v111
  %v114 = vld [vmem:[%s3] sm:$0xf]
  %v115 = vmul.f32 %v114, 0.1
  %v116 = vmul.f32 %v45, 0.9
  %v117 = vadd.f32 %v115, %v116
  %vm118 = vcmask 3072
  %119 = vst.msk [vmem:[%s6] sm:$0xf] %vm118, %v117
  %v120 = vld [vmem:[%s4] sm:$0xf]
  %v121 = vmul.f32 %v120, 0.1
  %v122 = vmul.f32 %v78, 0.9
  %v123 = vadd.f32 %v121, %v122
  %124 = vst.msk [vmem:[%s7] sm:$0xf] %vm118, %v123
  // Predicated region
  $region22: #{batch_norm_forward.1} parent=0 // pred_check
    _
  $region23: #{batch_norm_forward.1} parent=0 // pred_check_branch
    %126 = sbr.rel (0) target = $region25
  $region24: #{batch_norm_forward.1} parent=0 // pred_region
    _
  $region25: #{batch_norm_forward.1} parent=0 // pred_fallthru
    _
  // Predicated region
  $region26: #{batch_norm_forward.1} parent=0 // pred_check
    _
  $region27: #{batch_norm_forward.1} parent=0 // pred_check_branch
    %128 = sbr.rel (0) target = $region29
  $region28: #{batch_norm_forward.1} parent=0 // pred_region
    _
  $region29: #{batch_norm_forward.1} parent=0 // pred_fallthru
    _
  // Predicated region
  $region30: #{batch_norm_forward.1} parent=0 // pred_check
    _
  $region31: #{batch_norm_forward.1} parent=0 // pred_check_branch
    %130 = sbr.rel (0) target = $region33
  $region32: #{batch_norm_forward.1} parent=0 // pred_region
    _
  $region33: #{batch_norm_forward.1} parent=0 // pred_fallthru
    _
  // Predicated region
  $region34: #{batch_norm_forward.1} parent=0 // pred_check
    _
  $region35: #{batch_norm_forward.1} parent=0 // pred_check_branch
    %132 = sbr.rel (0) target = $region37
  $region36: #{batch_norm_forward.1} parent=0 // pred_region
    _
  $region37: #{batch_norm_forward.1} parent=0 // pred_fallthru
    _
  // Predicated region
  $region38: #{batch_norm_forward.1} parent=0 // pred_check
    _
  $region39: #{batch_norm_forward.1} parent=0 // pred_check_branch
    %134 = sbr.rel (0) target = $region41
  $region40: #{batch_norm_forward.1} parent=0 // pred_region
    _
  $region41: #{batch_norm_forward.1} parent=0 // pred_fallthru
    _
  // Predicated region
  $region42: #{batch_norm_forward.1} parent=0 // pred_check
    _
  $region43: #{batch_norm_forward.1} parent=0 // pred_check_branch
    %136 = sbr.rel (0) target = $region45
  $region44: #{batch_norm_forward.1} parent=0 // pred_region
    _
  $region45: #{batch_norm_forward.1} parent=0 // pred_fallthru
    _

</llo_original>
